<compile_context>
chip_gen: v5e
topology: v5e:2x2
jax: 0.10.0
libtpu: 0.0.40
codegen_flags: <defaults>
</compile_context>

<pallas_src>
import jax
import jax.numpy as jnp
from jax import lax
from jax.experimental import pallas as pl
from jax.experimental.pallas import tpu as pltpu

# ---------------- config (stand-in for DotMap args) ----------------
DIM_EMBS  = 128          # args.dim_embs  == ScorePredictor.hidden
PREDICTOR = "2-linear"   # args.predictor
NUM_EDGES = 16           # number of (u_e, u_v) pairs scored in the demo

_MAX_EDGE_TILE = 256     # edge-tile rows per grid step once E grows


def _edge_tiling(e):
    """Pad edge count to a multiple of 8 and pick a tile size / grid."""
    e8 = max(8, ((e + 7) // 8) * 8)
    te = min(_MAX_EDGE_TILE, e8)
    nt = pl.cdiv(e8, te)
    return te, nt, nt * te


# ============================================================================
# '2-linear' predictor:
#   h = LeakyReLU( u @ W1u + v @ W1v + b1 )        (== cat([u,v]) @ W1 + b1)
#   score = w2 . h + b2                            (lane-dense (1, TE) output)
# ============================================================================
def _mlp2_score_kernel(u_ref, v_ref, w1u_ref, w1v_ref, b1_ref, w2_ref, b2_ref,
                       score_ref):
    # bf16 MXU operands, f32 accumulation (negligible accuracy loss).
    u = u_ref[...].astype(jnp.bfloat16)
    v = v_ref[...].astype(jnp.bfloat16)
    h = jnp.dot(u, w1u_ref[...], preferred_element_type=jnp.float32)
    h = h + jnp.dot(v, w1v_ref[...], preferred_element_type=jnp.float32)
    h = h + b1_ref[...]                              # (TE, HID) f32
    h = jnp.where(h > 0, h, 0.01 * h)                # LeakyReLU(0.01), f32 VPU

    # Lane-dense score row: contract hidden dim of w2 (padded to 8 sublanes)
    # against hidden dim of h -> (8, TE); row 0 is the real score.
    s8 = lax.dot_general(w2_ref[...], h,
                         dimension_numbers=(((1,), (1,)), ((), ())),
                         preferred_element_type=jnp.float32)
    score_ref[0] = s8[0:1, :] + b2_ref[0, 0]         # b2 read from SMEM


def _predict_2linear(u_e, u_v, w1, b1, w2, b2):
    e, d = u_e.shape                    # d == hidden (dim_embs)
    hid = w1.shape[0]                   # torch Linear(2d, hid).weight: (hid, 2d)
    te, nt, e_full = _edge_tiling(e)

    pad = e_full - e
    u_p = jnp.pad(u_e, ((0, pad), (0, 0))) if pad else u_e
    v_p = jnp.pad(u_v, ((0, pad), (0, 0))) if pad else u_v

    # Split W1 into the u- / v-halves (math layout: (d, hid)), cast to bf16.
    w1u = w1[:, :d].T.astype(jnp.bfloat16)
    w1v = w1[:, d:].T.astype(jnp.bfloat16)
    b1r = b1.reshape(1, hid).astype(jnp.float32)
    w2p = jnp.zeros((8, hid), jnp.float32).at[0].set(w2.reshape(hid))
    b2r = jnp.asarray(b2, jnp.float32).reshape(1, 1)

    score = pl.pallas_call(
        _mlp2_score_kernel,
        out_shape=jax.ShapeDtypeStruct((nt, 1, te), jnp.float32),
        grid=(nt,),
        in_specs=[
            pl.BlockSpec((te, d), lambda i: (i, 0)),        # u tile
            pl.BlockSpec((te, d), lambda i: (i, 0)),        # v tile
            pl.BlockSpec((d, hid), lambda i: (0, 0)),       # W1u (VMEM-resident)
            pl.BlockSpec((d, hid), lambda i: (0, 0)),       # W1v
            pl.BlockSpec((1, hid), lambda i: (0, 0)),       # b1
            pl.BlockSpec((8, hid), lambda i: (0, 0)),       # w2 (padded to 8 rows)
            pl.BlockSpec(memory_space=pltpu.MemorySpace.SMEM),  # b2 scalar
        ],
        out_specs=pl.BlockSpec((1, 1, te), lambda i: (i, 0, 0)),
        compiler_params=pltpu.CompilerParams(dimension_semantics=("parallel",)),
    )(u_p, v_p, w1u, w1v, b1r, w2p, b2r)
    return score.reshape(e_full)[:e]


# ============================================================================
# 'dot' predictor: score = (u_e * u_v).sum(-1)
# ============================================================================
def _dot_score_kernel(u_ref, v_ref, score_ref):
    score_ref[...] = jnp.sum(u_ref[...] * v_ref[...], axis=-1, keepdims=True)


def _predict_dot(u_e, u_v):
    e, d = u_e.shape
    te, nt, e_full = _edge_tiling(e)
    pad = e_full - e
    u_p = jnp.pad(u_e, ((0, pad), (0, 0))) if pad else u_e
    v_p = jnp.pad(u_v, ((0, pad), (0, 0))) if pad else u_v
    score = pl.pallas_call(
        _dot_score_kernel,
        out_shape=jax.ShapeDtypeStruct((e_full, 1), jnp.float32),
        grid=(nt,),
        in_specs=[pl.BlockSpec((te, d), lambda i: (i, 0)),
                  pl.BlockSpec((te, d), lambda i: (i, 0))],
        out_specs=pl.BlockSpec((te, 1), lambda i: (i, 0)),
        compiler_params=pltpu.CompilerParams(dimension_semantics=("parallel",)),
    )(u_p, v_p)
    return score.reshape(e_full)[:e]


# ============================================================================
# ScorePredictor.forward
# ============================================================================
def score_predictor_forward(u_e, u_v, params=None, predictor=PREDICTOR):
    if predictor == "dot":
        return _predict_dot(u_e, u_v)
    if predictor == "2-linear":
        return _predict_2linear(u_e, u_v, *params)
    # TODO(synk): '1-linear' / '3-linear' / '4-linear' variants not wired up;
    # raise instead of silently producing an uninitialized output block.
    raise NotImplementedError(f"predictor={predictor!r} not implemented")


if __name__ == "__main__":
    key = jax.random.PRNGKey(0)
    k1, k2, k3, k4, k5, k6 = jax.random.split(key, 6)
    E, H = NUM_EDGES, DIM_EMBS

    u_e = jax.random.normal(k1, (E, H), jnp.float32)
    u_v = jax.random.normal(k2, (E, H), jnp.float32)

    # '2-linear' params in PyTorch layout: Linear(2H, H) then Linear(H, 1)
    w1 = jax.random.normal(k3, (H, 2 * H), jnp.float32) * 0.05   # (out, in)
    b1 = jax.random.normal(k4, (H,), jnp.float32) * 0.05
    w2 = jax.random.normal(k5, (1, H), jnp.float32) * 0.05
    b2 = jax.random.normal(k6, (1,), jnp.float32) * 0.05
    params = (w1, b1, w2, b2)

    score = score_predictor_forward(u_e, u_v, params, predictor="2-linear")
    score_dot = score_predictor_forward(u_e, u_v, predictor="dot")
    jax.block_until_ready((score, score_dot))

    # pure-JAX references (f32)
    x_ref = jnp.concatenate([u_e, u_v], axis=-1)
    h_ref = x_ref @ w1.T + b1
    h_ref = jnp.where(h_ref > 0, h_ref, 0.01 * h_ref)
    s_ref = (h_ref @ w2.T + b2).reshape(-1)
    d_ref = jnp.sum(u_e * u_v, axis=-1)

    assert score.shape == (E,) and score_dot.shape == (E,)
    assert jnp.allclose(score, s_ref, atol=2e-2, rtol=2e-2)       # bf16 matmul operands
    assert jnp.allclose(score_dot, d_ref, atol=1e-4, rtol=1e-4)
    print("KERNEL_OK")
</pallas_src>

<mosaic_0001>
module attributes {stable_mosaic.version = 11 : i64} {
  func.func @_mlp2_score_kernel(%arg0: i32, %arg1: memref<16x128xf32, #tpu.memory_space<vmem>>, %arg2: memref<16x128xf32, #tpu.memory_space<vmem>>, %arg3: memref<128x128xbf16, #tpu.memory_space<vmem>>, %arg4: memref<128x128xbf16, #tpu.memory_space<vmem>>, %arg5: memref<1x128xf32, #tpu.memory_space<vmem>>, %arg6: memref<8x128xf32, #tpu.memory_space<vmem>>, %arg7: memref<1x1xf32, #tpu.memory_space<smem>>, %arg8: memref<1x1x16xf32, #tpu.memory_space<vmem>>) attributes {dimension_semantics = [#tpu.dimension_semantics<parallel>], iteration_bounds = array<i64: 1>, scalar_prefetch = 0 : i64, scratch_operands = 0 : i64, tpu.core_type = #tpu.core_type<tc>, window_params = [{transform_indices = @transform_0, window_bounds = array<i64: 16, 128>}, {transform_indices = @transform_1, window_bounds = array<i64: 16, 128>}, {pipeline_mode = #tpu.pipeline_mode<synchronous>, transform_indices = @transform_2, window_bounds = array<i64: 128, 128>}, {pipeline_mode = #tpu.pipeline_mode<synchronous>, transform_indices = @transform_3, window_bounds = array<i64: 128, 128>}, {pipeline_mode = #tpu.pipeline_mode<synchronous>, transform_indices = @transform_4, window_bounds = array<i64: 1, 128>}, {pipeline_mode = #tpu.pipeline_mode<synchronous>, transform_indices = @transform_5, window_bounds = array<i64: 8, 128>}, {transform_indices = @transform_6, window_bounds = array<i64: 1, 1>}, {transform_indices = @transform_7, window_bounds = array<i64: 1, 1, 16>}]} {
    %c0 = arith.constant 0 : index
    %c0_0 = arith.constant 0 : index
    %0 = vector.load %arg1[%c0, %c0_0] : memref<16x128xf32, #tpu.memory_space<vmem>>, vector<16x128xf32>
    %1 = arith.truncf %0 : vector<16x128xf32> to vector<16x128xbf16>
    %c0_1 = arith.constant 0 : index
    %c0_2 = arith.constant 0 : index
    %2 = vector.load %arg2[%c0_1, %c0_2] : memref<16x128xf32, #tpu.memory_space<vmem>>, vector<16x128xf32>
    %3 = arith.truncf %2 : vector<16x128xf32> to vector<16x128xbf16>
    %c0_3 = arith.constant 0 : index
    %c0_4 = arith.constant 0 : index
    %4 = vector.load %arg3[%c0_3, %c0_4] : memref<128x128xbf16, #tpu.memory_space<vmem>>, vector<128x128xbf16>
    %cst = arith.constant dense<0.000000e+00> : vector<16x128xf32>
    %5 = tpu.matmul %1, %4, %cst {dimension_numbers = #tpu.dot_dimension_numbers<[1], [0], [0], [1], [0, 0, 1, 1], [], []>} : vector<16x128xbf16>, vector<128x128xbf16>, vector<16x128xf32> -> vector<16x128xf32>
    %c0_5 = arith.constant 0 : index
    %c0_6 = arith.constant 0 : index
    %6 = vector.load %arg4[%c0_5, %c0_6] : memref<128x128xbf16, #tpu.memory_space<vmem>>, vector<128x128xbf16>
    %cst_7 = arith.constant dense<0.000000e+00> : vector<16x128xf32>
    %7 = tpu.matmul %3, %6, %cst_7 {dimension_numbers = #tpu.dot_dimension_numbers<[1], [0], [0], [1], [0, 0, 1, 1], [], []>} : vector<16x128xbf16>, vector<128x128xbf16>, vector<16x128xf32> -> vector<16x128xf32>
    %8 = arith.addf %5, %7 : vector<16x128xf32>
    %c0_8 = arith.constant 0 : index
    %c0_9 = arith.constant 0 : index
    %9 = vector.load %arg5[%c0_8, %c0_9] : memref<1x128xf32, #tpu.memory_space<vmem>>, vector<1x128xf32>
    %10 = vector.broadcast %9 : vector<1x128xf32> to vector<16x128xf32>
    %11 = arith.addf %8, %10 : vector<16x128xf32>
    %cst_10 = arith.constant 0.000000e+00 : f32
    %12 = vector.broadcast %cst_10 : f32 to vector<16x128xf32>
    %13 = arith.cmpf ogt, %11, %12 : vector<16x128xf32>
    %cst_11 = arith.constant 0.00999999977 : f32
    %14 = vector.broadcast %cst_11 : f32 to vector<16x128xf32>
    %15 = arith.mulf %14, %11 : vector<16x128xf32>
    %16 = arith.select %13, %11, %15 : vector<16x128xi1>, vector<16x128xf32>
    %c0_12 = arith.constant 0 : index
    %c0_13 = arith.constant 0 : index
    %17 = vector.load %arg6[%c0_12, %c0_13] : memref<8x128xf32, #tpu.memory_space<vmem>>, vector<8x128xf32>
    %cst_14 = arith.constant dense<0.000000e+00> : vector<8x16xf32>
    %18 = tpu.matmul %17, %16, %cst_14 {dimension_numbers = #tpu.dot_dimension_numbers<[1], [1], [0], [0], [0, 0, 1, 0], [], []>} : vector<8x128xf32>, vector<16x128xf32>, vector<8x16xf32> -> vector<8x16xf32>
    %19 = vector.extract_strided_slice %18 {offsets = [0, 0], sizes = [1, 16], strides = [1, 1]} : vector<8x16xf32> to vector<1x16xf32>
    %c0_15 = arith.constant 0 : index
    %c0_16 = arith.constant 0 : index
    %20 = memref.load %arg7[%c0_15, %c0_16] : memref<1x1xf32, #tpu.memory_space<smem>>
    %21 = vector.broadcast %20 : f32 to vector<1x16xf32>
    %22 = arith.addf %19, %21 : vector<1x16xf32>
    %c0_17 = arith.constant 0 : index
    %c0_18 = arith.constant 0 : index
    %c0_19 = arith.constant 0 : index
    %23 = vector.load %arg8[%c0_17, %c0_18, %c0_19] : memref<1x1x16xf32, #tpu.memory_space<vmem>>, vector<1x1x16xf32>
    %24 = vector.shape_cast %23 : vector<1x1x16xf32> to vector<1x16xf32>
    %25 = vector.shape_cast %22 : vector<1x16xf32> to vector<1x1x16xf32>
    tpu.vector_store %arg8[%c0_17, %c0_18, %c0_19], %25 {strides = array<i32>} : memref<1x1x16xf32, #tpu.memory_space<vmem>>, vector<1x1x16xf32>,
    return
  }
  func.func @transform_0(%arg0: i32) -> (i32, i32) {
    %c0_i32 = arith.constant 0 : i32
    %c0_i32_0 = arith.constant 0 : i32
    return %arg0, %c0_i32 : i32, i32
  }
  func.func @transform_1(%arg0: i32) -> (i32, i32) {
    %c0_i32 = arith.constant 0 : i32
    %c0_i32_0 = arith.constant 0 : i32
    return %arg0, %c0_i32 : i32, i32
  }
  func.func @transform_2(%arg0: i32) -> (i32, i32) {
    %c0_i32 = arith.constant 0 : i32
    %c0_i32_0 = arith.constant 0 : i32
    %c0_i32_1 = arith.constant 0 : i32
    return %c0_i32, %c0_i32_0 : i32, i32
  }
  func.func @transform_3(%arg0: i32) -> (i32, i32) {
    %c0_i32 = arith.constant 0 : i32
    %c0_i32_0 = arith.constant 0 : i32
    %c0_i32_1 = arith.constant 0 : i32
    return %c0_i32, %c0_i32_0 : i32, i32
  }
  func.func @transform_4(%arg0: i32) -> (i32, i32) {
    %c0_i32 = arith.constant 0 : i32
    %c0_i32_0 = arith.constant 0 : i32
    %c0_i32_1 = arith.constant 0 : i32
    return %c0_i32, %c0_i32_0 : i32, i32
  }
  func.func @transform_5(%arg0: i32) -> (i32, i32) {
    %c0_i32 = arith.constant 0 : i32
    %c0_i32_0 = arith.constant 0 : i32
    %c0_i32_1 = arith.constant 0 : i32
    return %c0_i32, %c0_i32_0 : i32, i32
  }
  func.func @transform_6(%arg0: i32) -> (i32, i32) {
    %c0_i32 = arith.constant 0 : i32
    %c0_i32_0 = arith.constant 0 : i32
    %c0_i32_1 = arith.constant 0 : i32
    return %c0_i32, %c0_i32_0 : i32, i32
  }
  func.func @transform_7(%arg0: i32) -> (i32, i32, i32) {
    %c0_i32 = arith.constant 0 : i32
    %c0_i32_0 = arith.constant 0 : i32
    %c0_i32_1 = arith.constant 0 : i32
    return %arg0, %c0_i32, %c0_i32_0 : i32, i32, i32
  }
}

</mosaic_0001>

<llo_original>
// kernel: tpu_custom_call.1
$region0: #{tpu_custom_call.1}
  #allocation0 [shape = 'u32[]', space=smem, size = 0x4, offset = 0x4, fixed_abs, tag = 'smem constant byte address 0x4 - core index']
  #allocation1 [shape = 'u32[72,128]{1,0:T(1,128)}', space=vmem, size = 0x9000, scoped, tag = 'internal scratch']
  #allocation2 [shape = 'f32[1,1]{1,0:T(1,128)S(6)}', space=smem, size = 0x200, scoped, tag = 'scoped memory for tpu_custom_call.1']
  %s0 = inlined_call_operand.hbm [shape: f32[16,128], index: 0, kind: input, shape index: {}]
  %s1 = inlined_call_operand.hbm [shape: f32[16,128], index: 1, kind: input, shape index: {}]
  %s2 = inlined_call_operand.hbm [shape: bf16[128,128], index: 2, kind: input, shape index: {}]
  %s3 = inlined_call_operand.hbm [shape: bf16[128,128], index: 3, kind: input, shape index: {}]
  %s4 = inlined_call_operand.vmem [shape: f32[1,128], index: 4, kind: input, shape index: {}]
  %s5 = inlined_call_operand.hbm [shape: f32[8,128], index: 5, kind: input, shape index: {}]
  %s6 = inlined_call_operand.<no memory space> [shape: f32[1,1], index: 6, kind: input, shape index: {}]
  %s7 = inlined_call_operand.hbm [shape: f32[1,1,16], index: 7, kind: output, shape index: {}]
  %s8 = sld [smem:[#allocation0]]
  $region58: #{tpu_custom_call.1} parent=0
    _
  %s10 = ssub.s32 1, %s8
  %s11 = scalar_select 0, %s10, %s8
  %12 = sst [smem:[#allocation2]] %s6
  $region1: #{tpu_custom_call.1} parent=0
    #allocation3 [shape = 'u8[8192]{0}', space=vmem, size = 0x2000, scoped, tag = 'input window, operand 0, single buffered']
    #allocation4 [shape = 's32[1]{0}', space=sflag, size = 0x4, scoped, tag = 'scoped memory for tpu_custom_call.1']
    #allocation5 [shape = 's32[1]{0}', space=sflag, size = 0x4, scoped, tag = 'scoped memory for tpu_custom_call.1']
    #allocation6 [shape = 'u8[8192]{0}', space=vmem, size = 0x2000, scoped, tag = 'input window, operand 1, single buffered']
    #allocation7 [shape = 's32[1]{0}', space=sflag, size = 0x4, scoped, tag = 'scoped memory for tpu_custom_call.1']
    #allocation8 [shape = 'u8[32768]{0}', space=vmem, size = 0x8000, scoped, tag = 'input window, operand 2, single buffered']
    #allocation9 [shape = 'u8[32768]{0}', space=vmem, size = 0x8000, scoped, tag = 'input window, operand 3, single buffered']
    #allocation10 [shape = 's32[1]{0}', space=sflag, size = 0x4, scoped, tag = 'scoped memory for tpu_custom_call.1']
    #allocation11 [shape = 'u8[4096]{0}', space=vmem, size = 0x1000, scoped, tag = 'input window, operand 5, single buffered']
    #allocation12 [shape = 'u8[512]{0}', space=vmem, size = 0x400, scoped, tag = 'output window, operand 0, single buffered']
    %13 = vsyncpa [#allocation4], 0
    %14 = vsyncpa [#allocation7], 0
    %15 = vsyncpa [#allocation10], 0
    %16 = vsyncpa [#allocation5], 0
    // Predicated region
    $region2: #{tpu_custom_call.1} parent=1 // pred_check
      _
    $region3: #{tpu_custom_call.1} parent=1 // pred_check_branch
      %18 = sbr.rel (0) target = $region5
    $region4: #{tpu_custom_call.1} parent=1 // pred_region
      %20 = vsyncadd [#allocation4], 0
      %s21 = sshll.u32 %s0, 4
      %s22 = int_to_ptr.hbm [resolvable:$true] %s21
      %s23 = sshll.u32 [#allocation3], 4
      %s24 = int_to_ptr.vmem [resolvable:$true] %s23
      %29 = dma.hbm_to_vmem [thread:$0]  %s22, 256, %s24, [#allocation4], 128, 128, 8
    $region5: #{tpu_custom_call.1} parent=1 // pred_fallthru
      _
    // Predicated region
    $region6: #{tpu_custom_call.1} parent=1 // pred_check
      _
    $region7: #{tpu_custom_call.1} parent=1 // pred_check_branch
      %31 = sbr.rel (0) target = $region9
    $region8: #{tpu_custom_call.1} parent=1 // pred_region
      %33 = vsyncadd [#allocation7], 0
      %s34 = sshll.u32 %s1, 4
      %s35 = int_to_ptr.hbm [resolvable:$true] %s34
      %s36 = sshll.u32 [#allocation6], 4
      %s37 = int_to_ptr.vmem [resolvable:$true] %s36
      %42 = dma.hbm_to_vmem [thread:$0]  %s35, 256, %s37, [#allocation7], 128, 128, 8
    $region9: #{tpu_custom_call.1} parent=1 // pred_fallthru
      _
    // Predicated region
    $region10: #{tpu_custom_call.1} parent=1 // pred_check
      _
    $region11: #{tpu_custom_call.1} parent=1 // pred_check_branch
      %44 = sbr.rel (0) target = $region13
    $region12: #{tpu_custom_call.1} parent=1 // pred_region
      %46 = vsyncadd [#allocation7], 0
      %s47 = sshll.u32 %s2, 4
      %s48 = int_to_ptr.hbm [resolvable:$true] %s47
      %s49 = sshll.u32 [#allocation8], 4
      %s50 = int_to_ptr.vmem [resolvable:$true] %s49
      %55 = dma.hbm_to_vmem [thread:$0]  %s48, 1024, %s50, [#allocation7], 64, 64, 4
    $region13: #{tpu_custom_call.1} parent=1 // pred_fallthru
      _
    // Predicated region
    $region14: #{tpu_custom_call.1} parent=1 // pred_check
      _
    $region15: #{tpu_custom_call.1} parent=1 // pred_check_branch
      %57 = sbr.rel (0) target = $region17
    $region16: #{tpu_custom_call.1} parent=1 // pred_region
      %59 = vsyncadd [#allocation10], 0
      %s60 = sshll.u32 %s3, 4
      %s61 = int_to_ptr.hbm [resolvable:$true] %s60
      %s62 = sshll.u32 [#allocation9], 4
      %s63 = int_to_ptr.vmem [resolvable:$true] %s62
      %68 = dma.hbm_to_vmem [thread:$0]  %s61, 1024, %s63, [#allocation10], 64, 64, 4
    $region17: #{tpu_custom_call.1} parent=1 // pred_fallthru
      _
    // Predicated region
    $region18: #{tpu_custom_call.1} parent=1 // pred_check
      _
    $region19: #{tpu_custom_call.1} parent=1 // pred_check_branch
      %70 = sbr.rel (0) target = $region21
    $region20: #{tpu_custom_call.1} parent=1 // pred_region
      _
    $region21: #{tpu_custom_call.1} parent=1 // pred_fallthru
      _
    // Predicated region
    $region22: #{tpu_custom_call.1} parent=1 // pred_check
      _
    $region23: #{tpu_custom_call.1} parent=1 // pred_check_branch
      %72 = sbr.rel (0) target = $region25
    $region24: #{tpu_custom_call.1} parent=1 // pred_region
      %74 = vsyncadd [#allocation10], 0
      %s76 = sshll.u32 %s5, 4
      %s77 = int_to_ptr.hbm [resolvable:$true] %s76
      %s78 = sshll.u32 [#allocation11], 4
      %s79 = int_to_ptr.vmem [resolvable:$true] %s78
      %81 = dma.hbm_to_vmem [thread:$0]  %s77, 128, %s79, [#allocation10]
    $region25: #{tpu_custom_call.1} parent=1 // pred_fallthru
      _
    // Predicated region
    $region26: #{tpu_custom_call.1} parent=1 // pred_check
      _
    $region27: #{tpu_custom_call.1} parent=1 // pred_check_branch
      %83 = sbr.rel (0) target = $region29
    $region28: #{tpu_custom_call.1} parent=1 // pred_region
      _
    $region29: #{tpu_custom_call.1} parent=1 // pred_fallthru
      _
    // Predicated region
    $region30: #{tpu_custom_call.1} parent=1 // pred_check
      _
    $region31: #{tpu_custom_call.1} parent=1 // pred_check_branch
      %85 = sbr.rel (0) target = $region33
    $region32: #{tpu_custom_call.1} parent=1 // pred_region
      %87 = dma.done [#allocation4], 256
    $region33: #{tpu_custom_call.1} parent=1 // pred_fallthru
      _
    // Predicated region
    $region34: #{tpu_custom_call.1} parent=1 // pred_check
      _
    $region35: #{tpu_custom_call.1} parent=1 // pred_check_branch
      %89 = sbr.rel (0) target = $region37
    $region36: #{tpu_custom_call.1} parent=1 // pred_region
      %91 = dma.done [#allocation7], 256
    $region37: #{tpu_custom_call.1} parent=1 // pred_fallthru
      _
    // Predicated region
    $region38: #{tpu_custom_call.1} parent=1 // pred_check
      _
    $region39: #{tpu_custom_call.1} parent=1 // pred_check_branch
      %93 = sbr.rel (0) target = $region41
    $region40: #{tpu_custom_call.1} parent=1 // pred_region
      %95 = dma.done [#allocation7], 1024
    $region41: #{tpu_custom_call.1} parent=1 // pred_fallthru
      _
    // Predicated region
    $region42: #{tpu_custom_call.1} parent=1 // pred_check
      _
    $region43: #{tpu_custom_call.1} parent=1 // pred_check_branch
      %97 = sbr.rel (0) target = $region45
    $region44: #{tpu_custom_call.1} parent=1 // pred_region
      %99 = dma.done [#allocation10], 1024
    $region45: #{tpu_custom_call.1} parent=1 // pred_fallthru
      _
    // Predicated region
    $region46: #{tpu_custom_call.1} parent=1 // pred_check
      _
    $region47: #{tpu_custom_call.1} parent=1 // pred_check_branch
      %101 = sbr.rel (0) target = $region49
    $region48: #{tpu_custom_call.1} parent=1 // pred_region
      %103 = dma.done [#allocation10], 128
    $region49: #{tpu_custom_call.1} parent=1 // pred_fallthru
      _
    %v104 = vld [vmem:[#allocation3] sm:$0xff]
    %v105 = vld [vmem:[#allocation3 + $0x8] sm:$0xff]
    %v106 = vpack.c.bf16 %v105, %v104
    %v107 = vld [vmem:[#allocation6] sm:$0xff]
    %v108 = vld [vmem:[#allocation6 + $0x8] sm:$0xff]
    %v109 = vpack.c.bf16 %v108, %v107
    %v110 = vld [vmem:[#allocation8] sm:$0xf]
    %v111 = vld [vmem:[#allocation8 + $0x4] sm:$0xf]
    %v112 = vld [vmem:[#allocation8 + $0x8] sm:$0xf]
    %v113 = vld [vmem:[#allocation8 + $0xc] sm:$0xf]
    %v114 = vld [vmem:[#allocation8 + $0x10] sm:$0xf]
    %v115 = vld [vmem:[#allocation8 + $0x14] sm:$0xf]
    %v116 = vld [vmem:[#allocation8 + $0x18] sm:$0xf]
    %v117 = vld [vmem:[#allocation8 + $0x1c] sm:$0xf]
    %v118 = vld [vmem:[#allocation8 + $0x20] sm:$0xf]
    %v119 = vld [vmem:[#allocation8 + $0x24] sm:$0xf]
    %v120 = vld [vmem:[#allocation8 + $0x28] sm:$0xf]
    %v121 = vld [vmem:[#allocation8 + $0x2c] sm:$0xf]
    %v122 = vld [vmem:[#allocation8 + $0x30] sm:$0xf]
    %v123 = vld [vmem:[#allocation8 + $0x34] sm:$0xf]
    %v124 = vld [vmem:[#allocation8 + $0x38] sm:$0xf]
    %v125 = vld [vmem:[#allocation8 + $0x3c] sm:$0xf]
    %v126 = vld [vmem:[#allocation9] sm:$0xf]
    %v127 = vld [vmem:[#allocation9 + $0x4] sm:$0xf]
    %v128 = vld [vmem:[#allocation9 + $0x8] sm:$0xf]
    %v129 = vld [vmem:[#allocation9 + $0xc] sm:$0xf]
    %v130 = vld [vmem:[#allocation9 + $0x10] sm:$0xf]
    %v131 = vld [vmem:[#allocation9 + $0x14] sm:$0xf]
    %v132 = vld [vmem:[#allocation9 + $0x18] sm:$0xf]
    %v133 = vld [vmem:[#allocation9 + $0x1c] sm:$0xf]
    %v134 = vld [vmem:[#allocation9 + $0x20] sm:$0xf]
    %v135 = vld [vmem:[#allocation9 + $0x24] sm:$0xf]
    %v136 = vld [vmem:[#allocation9 + $0x28] sm:$0xf]
    %v137 = vld [vmem:[#allocation9 + $0x2c] sm:$0xf]
    %v138 = vld [vmem:[#allocation9 + $0x30] sm:$0xf]
    %v139 = vld [vmem:[#allocation9 + $0x34] sm:$0xf]
    %v140 = vld [vmem:[#allocation9 + $0x38] sm:$0xf]
    %v141 = vld [vmem:[#allocation9 + $0x3c] sm:$0xf]
    %v158 = vunpack.c.l.b16 %v126
    %v159 = vunpack.c.l.b16 %v127
    %v160 = vunpack.c.l.b16 %v128
    %v161 = vunpack.c.l.b16 %v129
    %v162 = vunpack.c.l.b16 %v130
    %v163 = vunpack.c.l.b16 %v131
    %v164 = vunpack.c.l.b16 %v132
    %v165 = vunpack.c.l.b16 %v133
    %v166 = vunpack.c.l.b16 %v134
    %v167 = vunpack.c.l.b16 %v135
    %v168 = vunpack.c.l.b16 %v136
    %v169 = vunpack.c.l.b16 %v137
    %v170 = vunpack.c.l.b16 %v138
    %v171 = vunpack.c.l.b16 %v139
    %v172 = vunpack.c.l.b16 %v140
    %v173 = vunpack.c.l.b16 %v141
    %v174 = vpack.c.b16 %v159, %v158
    %v175 = vpack.c.b16 %v161, %v160
    %v176 = vpack.c.b16 %v163, %v162
    %v177 = vpack.c.b16 %v165, %v164
    %v178 = vpack.c.b16 %v167, %v166
    %v179 = vpack.c.b16 %v169, %v168
    %v180 = vpack.c.b16 %v171, %v170
    %v181 = vpack.c.b16 %v173, %v172
    %190 = vmatpush.bf16.msra.mxu0 %v181
    %191 = vmatpush.bf16.msra.mxu0 %v180
    %192 = vmatpush.bf16.msra.mxu0 %v179
    %193 = vmatpush.bf16.msra.mxu0 %v178
    %194 = vmatpush.bf16.msra.mxu0 %v177
    %195 = vmatpush.bf16.msra.mxu0 %v176
    %196 = vmatpush.bf16.msra.mxu0 %v175
    %197 = vmatpush.bf16.msra.mxu0 %v174
    %198 = vmatmul.bf16.gmra.mxu0 %v109
    %v199 = vpop.f32.mrf.mxu0
    %v200 = vadd.f32 0.0, %v199
    %v201 = vpop.f32.mrf.mxu0
    %v202 = vadd.f32 0.0, %v201
    %203 = vdwg.mxu0
    %v220 = vunpack.c.l.b16 %v110
    %v221 = vunpack.c.l.b16 %v111
    %v222 = vunpack.c.l.b16 %v112
    %v223 = vunpack.c.l.b16 %v113
    %v224 = vunpack.c.l.b16 %v114
    %v225 = vunpack.c.l.b16 %v115
    %v226 = vunpack.c.l.b16 %v116
    %v227 = vunpack.c.l.b16 %v117
    %v228 = vunpack.c.l.b16 %v118
    %v229 = vunpack.c.l.b16 %v119
    %v230 = vunpack.c.l.b16 %v120
    %v231 = vunpack.c.l.b16 %v121
    %v232 = vunpack.c.l.b16 %v122
    %v233 = vunpack.c.l.b16 %v123
    %v234 = vunpack.c.l.b16 %v124
    %v235 = vunpack.c.l.b16 %v125
    %v236 = vpack.c.b16 %v221, %v220
    %v237 = vpack.c.b16 %v223, %v222
    %v238 = vpack.c.b16 %v225, %v224
    %v239 = vpack.c.b16 %v227, %v226
    %v240 = vpack.c.b16 %v229, %v228
    %v241 = vpack.c.b16 %v231, %v230
    %v242 = vpack.c.b16 %v233, %v232
    %v243 = vpack.c.b16 %v235, %v234
    %252 = vmatpush.bf16.msra.mxu0 %v243
    %253 = vmatpush.bf16.msra.mxu0 %v242
    %254 = vmatpush.bf16.msra.mxu0 %v241
    %255 = vmatpush.bf16.msra.mxu0 %v240
    %256 = vmatpush.bf16.msra.mxu0 %v239
    %257 = vmatpush.bf16.msra.mxu0 %v238
    %258 = vmatpush.bf16.msra.mxu0 %v237
    %259 = vmatpush.bf16.msra.mxu0 %v236
    %260 = vmatmul.bf16.gmra.mxu0 %v106
    %v261 = vpop.f32.mrf.mxu0
    %v262 = vadd.f32 %v200, %v261
    %v263 = vpop.f32.mrf.mxu0
    %v264 = vadd.f32 %v202, %v263
    %265 = vdwg.mxu0
    %v266 = vld [vmem:[%s4] sm:$0x1]
    %v268 = vperm.slane %v266, 0
    %v270 = vadd.f32 %v262, %v268
    %v271 = vadd.f32 %v264, %v268
    %vm272 = vcmp.gt.f32.partialorder %v270, 0.0
    %vm273 = vcmp.gt.f32.partialorder %v271, 0.0
    %v274 = vmul.f32 %v270, 0.01
    %v275 = vmul.f32 %v271, 0.01
    %v276 = vsel %vm272, %v270, %v274
    %v277 = vsel %vm273, %v271, %v275
    %v278 = vld [vmem:[#allocation11] sm:$0xff]
    %279 = vmatpush.xpose.msra.mxu0 0.0
    %280 = vmatpush.xpose.msra.mxu0 0.0
    %281 = vmatpush.xpose.msra.mxu0 0.0
    %282 = vmatpush.xpose.msra.mxu0 0.0
    %283 = vmatpush.xpose.msra.mxu0 0.0
    %284 = vmatpush.xpose.msra.mxu0 0.0
    %285 = vmatpush.xpose.msra.mxu0 0.0
    %286 = vmatpush.xpose.msra.mxu0 0.0
    %287 = vmatpush.xpose.msra.mxu0 0.0
    %288 = vmatpush.xpose.msra.mxu0 0.0
    %289 = vmatpush.xpose.msra.mxu0 0.0
    %290 = vmatpush.xpose.msra.mxu0 0.0
    %291 = vmatpush.xpose.msra.mxu0 0.0
    %292 = vmatpush.xpose.msra.mxu0 0.0
    %293 = vmatpush.xpose.msra.mxu0 %v277
    %294 = vmatpush.xpose.msra.mxu0 %v276
    %295 = vmatmul.f32.gmra.mxu0 %v278
    %v296 = vpop.f32.mrf.mxu0
    %v297 = vadd.f32 0.0, %v296
    %298 = vdwg.mxu0
    %s299 = sld [smem:[#allocation2]]
    %v300 = vstv %s299
    %v301 = vadd.f32 %v297, %v300
    %vm302 = vcmask 122880
    %303 = vst.msk [vmem:[#allocation12] sm:$0x1] %vm302, %v301
    // Predicated region
    $region50: #{tpu_custom_call.1} parent=1 // pred_check
      _
    $region51: #{tpu_custom_call.1} parent=1 // pred_check_branch
      %305 = sbr.rel (0) target = $region53
    $region52: #{tpu_custom_call.1} parent=1 // pred_region
      %307 = vsyncadd [#allocation5], 0
      %s309 = sshll.u32 [#allocation12], 4
      %s310 = int_to_ptr.vmem [resolvable:$true] %s309
      %s311 = sshll.u32 %s7, 4
      %s312 = int_to_ptr.hbm [resolvable:$true] %s311
      %314 = dma.vmem_to_hbm [thread:$0]  %s310, 16, %s312, [#allocation5]
    $region53: #{tpu_custom_call.1} parent=1 // pred_fallthru
      _
    // Predicated region
    $region54: #{tpu_custom_call.1} parent=1 // pred_check
      _
    $region55: #{tpu_custom_call.1} parent=1 // pred_check_branch
      %316 = sbr.rel (0) target = $region57
    $region56: #{tpu_custom_call.1} parent=1 // pred_region
      %318 = dma.done [#allocation5], 16
    $region57: #{tpu_custom_call.1} parent=1 // pred_fallthru
      _
    %319 = vsyncpa [#allocation4], 1
    %320 = vsyncpa [#allocation7], 1
    %321 = vsyncpa [#allocation10], 1
    %322 = vsyncpa [#allocation5], 1

</llo_original>
